<compile_context>
chip_gen: v7x
topology: tpu7x:2x2x1
jax: 0.10.0
libtpu: 0.0.40
codegen_flags: <defaults>
</compile_context>

<pallas_src>
import jax
import jax.numpy as jnp
from jax.experimental import pallas as pl
from jax.experimental.pallas import tpu as pltpu

K = 7        # spectral kernel size
STRIDE = 3   # spectral stride


def spe_conv_kernel(m_ref, x_ref, o_ref):
    # m_ref: (R, D)              conv folded into a dense matrix (R = OC*D_out)
    # x_ref: (Nb, D, hw)         VMEM input block
    # o_ref: (Nb, R, hw)         VMEM output block (NCDHW-contiguous rows)
    m = m_ref[...]
    Nb = x_ref.shape[0]
    for nb in range(Nb):                     # small, fully unrolled
        o_ref[nb] = jnp.dot(
            m, x_ref[nb], preferred_element_type=jnp.float32
        ).astype(o_ref.dtype)


def spe_module_in(x, weight):
    """x: (N, D, H, W); weight: (OC, 1, K, 1, 1) as in nn.Conv3d."""
    N, D, H, W = x.shape
    OC = weight.shape[0]
    HW = H * W
    D_out = (D - K) // STRIDE + 1
    assert D_out >= 1, "spectral depth must be >= kernel size (7)"
    R = OC * D_out

    x_r = x.reshape(N, D, HW)
    itemsize = x.dtype.itemsize

    # Fold the strided spectral conv into one dense (R, D) matrix:
    #   M[oc*D_out + d, d*STRIDE + k] = w[oc, k]
    w2 = weight.reshape(OC, K).astype(jnp.float32)
    tap = jnp.arange(D_out)[:, None] * STRIDE + jnp.arange(K)[None, :]   # (D_out, K)
    sel = jax.nn.one_hot(tap, D, dtype=jnp.float32)                      # (D_out, K, D)
    m = jnp.einsum('ok,dkc->odc', w2, sel).reshape(R, D).astype(x.dtype)

    # Samples per grid step: amortize the ~600-cycle per-step overhead while
    # keeping the input block modest.
    bytes_per_sample = D * HW * itemsize
    Nb = 1
    for cand in (8, 4, 2):
        if N % cand == 0 and cand * bytes_per_sample <= (4 << 20):
            Nb = cand
            break

    # Lane (HW) tiling only for large inputs; tiles stay multiples of 128 so
    # stores remain unmasked and blocks fit v7x's smaller VMEM when
    # double-buffered.
    hw_tile = HW
    target = 6 << 20
    if HW % 128 == 0 and Nb * bytes_per_sample > target:
        for cand in (32768, 16384, 8192, 4096, 2048, 1024, 512, 256, 128):
            if HW % cand == 0 and Nb * D * cand * itemsize <= target:
                hw_tile = cand
                break

    in_block = Nb * D * hw_tile * itemsize
    out_block = Nb * R * hw_tile * itemsize
    vmem_need = 2 * (in_block + out_block) + R * D * itemsize
    compiler_kwargs = dict(dimension_semantics=("parallel", "parallel"))
    if vmem_need > (12 << 20):  # exceed small default scoped limits (v5e)
        compiler_kwargs["vmem_limit_bytes"] = int(min(2 * vmem_need, 96 << 20))

    out = pl.pallas_call(
        spe_conv_kernel,
        out_shape=jax.ShapeDtypeStruct((N, R, HW), x.dtype),
        grid_spec=pltpu.PrefetchScalarGridSpec(
            num_scalar_prefetch=0,
            grid=(N // Nb, HW // hw_tile),
            in_specs=[
                pl.BlockSpec((R, D), lambda n, h: (0, 0)),                 # M (resident)
                pl.BlockSpec((Nb, D, hw_tile), lambda n, h: (n, 0, h)),    # x block
            ],
            out_specs=pl.BlockSpec((Nb, R, hw_tile), lambda n, h: (n, 0, h)),
        ),
        compiler_params=pltpu.CompilerParams(**compiler_kwargs),
    )(m, x_r)

    # (N, OC*D_out, HW) is already NCDHW-contiguous: split axes with a free
    # reshape (no transpose pass over HBM).
    out = out.reshape(N, OC, D_out, H, W)
    if OC == 1:  # torch's .squeeze(1) only removes a size-1 dim
        out = out.reshape(N, D_out, H, W)
    return out


def ref_forward(x, weight):
    """Pure-JAX reference of the PyTorch forward (no Pallas)."""
    N, D, H, W = x.shape
    OC = weight.shape[0]
    w2 = weight.reshape(OC, K)
    D_out = (D - K) // STRIDE + 1
    outs = []
    for d in range(D_out):
        win = x[:, d * STRIDE:d * STRIDE + K]                 # (N, K, H, W)
        outs.append(jnp.einsum('ok,nkhw->nohw', w2, win))
    out = jnp.stack(outs, axis=2)                             # (N, OC, D_out, H, W)
    if OC == 1:
        out = out[:, 0]
    return out


if __name__ == "__main__":
    key = jax.random.PRNGKey(0)
    k_x, k_w = jax.random.split(key)

    # in_channels must be 1 for the forward (input.unsqueeze(1) creates it).
    N, D, H, W = 2, 16, 16, 16   # D = spectral bands; D_out = (16-7)//3 + 1 = 4
    OC = 4

    x = jax.random.normal(k_x, (N, D, H, W), dtype=jnp.float32)
    # deterministic Conv3d-shaped weight: (OC, 1, 7, 1, 1)
    weight = 0.1 * jax.random.normal(k_w, (OC, 1, K, 1, 1), dtype=jnp.float32)

    out = spe_module_in(x, weight)
    out = jax.block_until_ready(out)

    ref = ref_forward(x, weight)
    assert out.shape == ref.shape, (out.shape, ref.shape)
    assert jnp.allclose(out, ref, atol=1e-5, rtol=1e-5), "mismatch vs reference"

    print("KERNEL_OK")
</pallas_src>

<mosaic_0001>
module attributes {stable_mosaic.version = 11 : i64} {
  func.func @spe_conv_kernel(%arg0: i32, %arg1: i32, %arg2: memref<16x16xf32, #tpu.memory_space<vmem>>, %arg3: memref<2x16x256xf32, #tpu.memory_space<vmem>>, %arg4: memref<2x16x256xf32, #tpu.memory_space<vmem>>) attributes {dimension_semantics = [#tpu.dimension_semantics<parallel>, #tpu.dimension_semantics<parallel>], iteration_bounds = array<i64: 1, 1>, scalar_prefetch = 0 : i64, scratch_operands = 0 : i64, tpu.core_type = #tpu.core_type<tc>, window_params = [{pipeline_mode = #tpu.pipeline_mode<synchronous>, transform_indices = @transform_0, window_bounds = array<i64: 16, 16>}, {transform_indices = @transform_1, window_bounds = array<i64: 2, 16, 256>}, {transform_indices = @transform_2, window_bounds = array<i64: 2, 16, 256>}]} {
    %c0 = arith.constant 0 : index
    %c0_0 = arith.constant 0 : index
    %0 = vector.load %arg2[%c0, %c0_0] : memref<16x16xf32, #tpu.memory_space<vmem>>, vector<16x16xf32>
    %c0_1 = arith.constant 0 : index
    %c0_2 = arith.constant 0 : index
    %c0_3 = arith.constant 0 : index
    %1 = vector.load %arg3[%c0_1, %c0_2, %c0_3] : memref<2x16x256xf32, #tpu.memory_space<vmem>>, vector<1x16x256xf32>
    %2 = vector.shape_cast %1 : vector<1x16x256xf32> to vector<16x256xf32>
    %cst = arith.constant dense<0.000000e+00> : vector<16x256xf32>
    %3 = tpu.matmul %0, %2, %cst {dimension_numbers = #tpu.dot_dimension_numbers<[1], [0], [0], [1], [0, 0, 1, 1], [], []>} : vector<16x16xf32>, vector<16x256xf32>, vector<16x256xf32> -> vector<16x256xf32>
    %c0_4 = arith.constant 0 : index
    %c0_5 = arith.constant 0 : index
    %c0_6 = arith.constant 0 : index
    %4 = vector.load %arg4[%c0_4, %c0_5, %c0_6] : memref<2x16x256xf32, #tpu.memory_space<vmem>>, vector<1x16x256xf32>
    %5 = vector.shape_cast %4 : vector<1x16x256xf32> to vector<16x256xf32>
    %6 = vector.shape_cast %3 : vector<16x256xf32> to vector<1x16x256xf32>
    tpu.vector_store %arg4[%c0_4, %c0_5, %c0_6], %6 {strides = array<i32>} : memref<2x16x256xf32, #tpu.memory_space<vmem>>, vector<1x16x256xf32>,
    %c1 = arith.constant 1 : index
    %c0_7 = arith.constant 0 : index
    %c0_8 = arith.constant 0 : index
    %7 = vector.load %arg3[%c1, %c0_7, %c0_8] : memref<2x16x256xf32, #tpu.memory_space<vmem>>, vector<1x16x256xf32>
    %8 = vector.shape_cast %7 : vector<1x16x256xf32> to vector<16x256xf32>
    %cst_9 = arith.constant dense<0.000000e+00> : vector<16x256xf32>
    %9 = tpu.matmul %0, %8, %cst_9 {dimension_numbers = #tpu.dot_dimension_numbers<[1], [0], [0], [1], [0, 0, 1, 1], [], []>} : vector<16x16xf32>, vector<16x256xf32>, vector<16x256xf32> -> vector<16x256xf32>
    %c1_10 = arith.constant 1 : index
    %c0_11 = arith.constant 0 : index
    %c0_12 = arith.constant 0 : index
    %10 = vector.load %arg4[%c1_10, %c0_11, %c0_12] : memref<2x16x256xf32, #tpu.memory_space<vmem>>, vector<1x16x256xf32>
    %11 = vector.shape_cast %10 : vector<1x16x256xf32> to vector<16x256xf32>
    %12 = vector.shape_cast %9 : vector<16x256xf32> to vector<1x16x256xf32>
    tpu.vector_store %arg4[%c1_10, %c0_11, %c0_12], %12 {strides = array<i32>} : memref<2x16x256xf32, #tpu.memory_space<vmem>>, vector<1x16x256xf32>,
    return
  }
  func.func @transform_0(%arg0: i32, %arg1: i32) -> (i32, i32) {
    %c0_i32 = arith.constant 0 : i32
    %c0_i32_0 = arith.constant 0 : i32
    %c0_i32_1 = arith.constant 0 : i32
    return %c0_i32, %c0_i32_0 : i32, i32
  }
  func.func @transform_1(%arg0: i32, %arg1: i32) -> (i32, i32, i32) {
    %c0_i32 = arith.constant 0 : i32
    %c0_i32_0 = arith.constant 0 : i32
    return %arg0, %c0_i32, %arg1 : i32, i32, i32
  }
  func.func @transform_2(%arg0: i32, %arg1: i32) -> (i32, i32, i32) {
    %c0_i32 = arith.constant 0 : i32
    %c0_i32_0 = arith.constant 0 : i32
    return %arg0, %c0_i32, %arg1 : i32, i32, i32
  }
}

</mosaic_0001>

<llo_original>
// kernel: tpu_custom_call.1
$region0: #{tpu_custom_call.1}
  #allocation0 [shape = 'u32[]', space=smem, size = 0x4, offset = 0x4, fixed_abs, tag = 'smem constant byte address 0x4 - core index']
  #allocation1 [shape = 'u32[144,128]{1,0:T(1,128)}', space=vmem, size = 0x12000, scoped, tag = 'internal scratch']
  %s0 = inlined_call_operand.hbm [shape: f32[16,16], index: 0, kind: input, shape index: {}]
  %s1 = inlined_call_operand.hbm [shape: f32[2,16,256], index: 1, kind: input, shape index: {}]
  %s2 = inlined_call_operand.hbm [shape: f32[2,16,256], index: 2, kind: output, shape index: {}]
  %s3 = sld [smem:[#allocation0]]
  $region26: #{tpu_custom_call.1} parent=0
    _
  %s5 = ssub.s32 1, %s3
  %s6 = scalar_select 0, %s5, %s3
  $region1: #{tpu_custom_call.1} parent=0
    #allocation2 [shape = 'u8[8192]{0}', space=vmem, size = 0x2000, scoped, tag = 'input window, operand 0, single buffered']
    #allocation3 [shape = 's32[1]{0}', space=sflag, size = 0x4, scoped, tag = 'scoped memory for tpu_custom_call.1']
    #allocation4 [shape = 's32[1]{0}', space=sflag, size = 0x4, scoped, tag = 'scoped memory for tpu_custom_call.1']
    #allocation5 [shape = 'u8[32768]{0}', space=vmem, size = 0x8000, scoped, tag = 'input window, operand 1, single buffered']
    #allocation6 [shape = 's32[1]{0}', space=sflag, size = 0x4, scoped, tag = 'scoped memory for tpu_custom_call.1']
    #allocation7 [shape = 'u8[32768]{0}', space=vmem, size = 0x8000, scoped, tag = 'output window, operand 0, single buffered']
    %7 = vsyncpa [#allocation3], 0
    %8 = vsyncpa [#allocation6], 0
    %9 = vsyncpa [#allocation4], 0
    // Predicated region
    $region2: #{tpu_custom_call.1} parent=1 // pred_check
      _
    $region3: #{tpu_custom_call.1} parent=1 // pred_check_branch
      %11 = sbr.rel (0) target = $region5
    $region4: #{tpu_custom_call.1} parent=1 // pred_region
      %s13 = ssub.s32 256, 256
      %14 = vsyncadd [#allocation3], %s13
      %s15 = sshll.u32 [#allocation2], 4
      %s16 = int_to_ptr.vmem [resolvable:$true] %s15
      %21 = dma.hbm_to_vmem [thread:$0]  %s0, 256, %s16, [#allocation3], 128, 128, 8
    $region5: #{tpu_custom_call.1} parent=1 // pred_fallthru
      _
    // Predicated region
    $region6: #{tpu_custom_call.1} parent=1 // pred_check
      _
    $region7: #{tpu_custom_call.1} parent=1 // pred_check_branch
      %23 = sbr.rel (0) target = $region9
    $region8: #{tpu_custom_call.1} parent=1 // pred_region
      %s25 = ssub.s32 1024, 1024
      %26 = vsyncadd [#allocation6], %s25
      %s27 = sshll.u32 [#allocation5], 4
      %s28 = int_to_ptr.vmem [resolvable:$true] %s27
      %33 = dma.hbm_to_vmem [thread:$0]  %s1, 1024, %s28, [#allocation6], 256, 256, 16
    $region9: #{tpu_custom_call.1} parent=1 // pred_fallthru
      _
    // Predicated region
    $region10: #{tpu_custom_call.1} parent=1 // pred_check
      _
    $region11: #{tpu_custom_call.1} parent=1 // pred_check_branch
      %35 = sbr.rel (0) target = $region13
    $region12: #{tpu_custom_call.1} parent=1 // pred_region
      %36 = dma.done [#allocation3], 256
    $region13: #{tpu_custom_call.1} parent=1 // pred_fallthru
      _
    // Predicated region
    $region14: #{tpu_custom_call.1} parent=1 // pred_check
      _
    $region15: #{tpu_custom_call.1} parent=1 // pred_check_branch
      %38 = sbr.rel (0) target = $region17
    $region16: #{tpu_custom_call.1} parent=1 // pred_region
      %39 = dma.done [#allocation6], 1024
    $region17: #{tpu_custom_call.1} parent=1 // pred_fallthru
      _
    %v40 = vld [vmem:[#allocation2] sm:$0xff]
    %v41 = vld [vmem:[#allocation2 + $0x8] sm:$0xff]
    %v42 = vld [vmem:[#allocation5] sm:$0xff]
    %v43 = vld [vmem:[#allocation5 + $0x8] sm:$0xff]
    %v44 = vld [vmem:[#allocation5 + $0x10] sm:$0xff]
    %v45 = vld [vmem:[#allocation5 + $0x18] sm:$0xff]
    %vm46 = vcmask 130048
    %v48 = vsel %vm46, %v40, 0
    %v51 = vsel %vm46, %v41, 0
    %53 = vmatprep.subr.mxu0 %v43
    %54 = vmatpush1.msra.mxu0 %v42
    %55 = vmatprep.subr.mxu0 %v45
    %56 = vmatpush1.msra.mxu0 %v44
    %57 = vmatprep.subr.mxu0 0.0
    %58 = vmatpush1.msra.mxu0 0.0
    %59 = vmatprep.subr.mxu0 0.0
    %60 = vmatpush1.msra.mxu0 0.0
    %61 = vmatprep.subr.mxu0 0.0
    %62 = vmatpush1.msra.mxu0 0.0
    %63 = vmatprep.subr.mxu0 0.0
    %64 = vmatpush1.msra.mxu0 0.0
    %65 = vmatprep.subr.mxu0 0.0
    %66 = vmatpush1.msra.mxu0 0.0
    %67 = vmatprep.subr.mxu0 0.0
    %68 = vmatpush1.msra.mxu0 0.0
    %69 = vmatprep.subr.mxu0 0.0
    %70 = vmatpush1.msra.mxu0 0.0
    %71 = vmatprep.subr.mxu0 0.0
    %72 = vmatpush1.msra.mxu0 0.0
    %73 = vmatprep.subr.mxu0 0.0
    %74 = vmatpush1.msra.mxu0 0.0
    %75 = vmatprep.subr.mxu0 0.0
    %76 = vmatpush1.msra.mxu0 0.0
    %77 = vmatprep.subr.mxu0 0.0
    %78 = vmatpush1.msra.mxu0 0.0
    %79 = vmatprep.subr.mxu0 0.0
    %80 = vmatpush1.msra.mxu0 0.0
    %81 = vmatprep.subr.mxu0 0.0
    %82 = vmatpush1.msra.mxu0 0.0
    %83 = vmatprep.subr.mxu0 0.0
    %84 = vmatpush1.msra.mxu0 0.0
    %85 = vmatprep.subr.mxu0 0.0
    %86 = vmatpush1.msra.mxu0 0.0
    %87 = vmatprep.subr.mxu0 0.0
    %88 = vmatpush1.msra.mxu0 0.0
    %89 = vmatprep.subr.mxu0 0.0
    %90 = vmatpush1.msra.mxu0 0.0
    %91 = vmatprep.subr.mxu0 0.0
    %92 = vmatpush1.msra.mxu0 0.0
    %93 = vmatprep.subr.mxu0 0.0
    %94 = vmatpush1.msra.mxu0 0.0
    %95 = vmatprep.subr.mxu0 0.0
    %96 = vmatpush1.msra.mxu0 0.0
    %97 = vmatprep.subr.mxu0 0.0
    %98 = vmatpush1.msra.mxu0 0.0
    %99 = vmatprep.subr.mxu0 0.0
    %100 = vmatpush1.msra.mxu0 0.0
    %101 = vmatprep.subr.mxu0 0.0
    %102 = vmatpush1.msra.mxu0 0.0
    %103 = vmatprep.subr.mxu0 0.0
    %104 = vmatpush1.msra.mxu0 0.0
    %105 = vmatprep.subr.mxu0 0.0
    %106 = vmatpush1.msra.mxu0 0.0
    %107 = vmatprep.subr.mxu0 0.0
    %108 = vmatpush1.msra.mxu0 0.0
    %109 = vmatprep.subr.mxu0 0.0
    %110 = vmatpush1.msra.mxu0 0.0
    %111 = vmatprep.subr.mxu0 0.0
    %112 = vmatpush1.msra.mxu0 0.0
    %113 = vmatprep.subr.mxu0 0.0
    %114 = vmatpush1.msra.mxu0 0.0
    %115 = vmatprep.subr.mxu0 0.0
    %116 = vmatpush1.msra.mxu0 0.0
    %117 = vmatprep.mubr.f32.mxu0 0.0
    %118 = vmatmul.mubr.f32.gmra.mrb[0].mxu0 %v48
    %v119 = vpop.f32.mrb[0].mxu0
    %v120 = vadd.f32 0.0, %v119
    %v121 = vpop.f32.mrb[0].mxu0
    %v122 = vadd.f32 0.0, %v121
    %123 = vmatprep.mubr.f32.mxu0 0.0
    %124 = vmatmul.mubr.f32.gmra.mrb[0].mxu0 %v51
    %v125 = vpop.f32.mrb[0].mxu0
    %v126 = vadd.f32 0.0, %v125
    %v127 = vpop.f32.mrb[0].mxu0
    %v128 = vadd.f32 0.0, %v127
    %129 = vdwg.mxu0
    %130 = vst [vmem:[#allocation7] sm:$0xff] %v120
    %131 = vst [vmem:[#allocation7 + $0x8] sm:$0xff] %v122
    %132 = vst [vmem:[#allocation7 + $0x10] sm:$0xff] %v126
    %133 = vst [vmem:[#allocation7 + $0x18] sm:$0xff] %v128
    %s134 = scalar_lea.vmem [#allocation5], 32
    %v135 = vld [vmem:[%s134] sm:$0xff]
    %v136 = vld [vmem:[%s134 + $0x8] sm:$0xff]
    %v137 = vld [vmem:[%s134 + $0x10] sm:$0xff]
    %v138 = vld [vmem:[%s134 + $0x18] sm:$0xff]
    %139 = vmatprep.subr.mxu0 %v136
    %140 = vmatpush1.msra.mxu0 %v135
    %141 = vmatprep.subr.mxu0 %v138
    %142 = vmatpush1.msra.mxu0 %v137
    %143 = vmatprep.subr.mxu0 0.0
    %144 = vmatpush1.msra.mxu0 0.0
    %145 = vmatprep.subr.mxu0 0.0
    %146 = vmatpush1.msra.mxu0 0.0
    %147 = vmatprep.subr.mxu0 0.0
    %148 = vmatpush1.msra.mxu0 0.0
    %149 = vmatprep.subr.mxu0 0.0
    %150 = vmatpush1.msra.mxu0 0.0
    %151 = vmatprep.subr.mxu0 0.0
    %152 = vmatpush1.msra.mxu0 0.0
    %153 = vmatprep.subr.mxu0 0.0
    %154 = vmatpush1.msra.mxu0 0.0
    %155 = vmatprep.subr.mxu0 0.0
    %156 = vmatpush1.msra.mxu0 0.0
    %157 = vmatprep.subr.mxu0 0.0
    %158 = vmatpush1.msra.mxu0 0.0
    %159 = vmatprep.subr.mxu0 0.0
    %160 = vmatpush1.msra.mxu0 0.0
    %161 = vmatprep.subr.mxu0 0.0
    %162 = vmatpush1.msra.mxu0 0.0
    %163 = vmatprep.subr.mxu0 0.0
    %164 = vmatpush1.msra.mxu0 0.0
    %165 = vmatprep.subr.mxu0 0.0
    %166 = vmatpush1.msra.mxu0 0.0
    %167 = vmatprep.subr.mxu0 0.0
    %168 = vmatpush1.msra.mxu0 0.0
    %169 = vmatprep.subr.mxu0 0.0
    %170 = vmatpush1.msra.mxu0 0.0
    %171 = vmatprep.subr.mxu0 0.0
    %172 = vmatpush1.msra.mxu0 0.0
    %173 = vmatprep.subr.mxu0 0.0
    %174 = vmatpush1.msra.mxu0 0.0
    %175 = vmatprep.subr.mxu0 0.0
    %176 = vmatpush1.msra.mxu0 0.0
    %177 = vmatprep.subr.mxu0 0.0
    %178 = vmatpush1.msra.mxu0 0.0
    %179 = vmatprep.subr.mxu0 0.0
    %180 = vmatpush1.msra.mxu0 0.0
    %181 = vmatprep.subr.mxu0 0.0
    %182 = vmatpush1.msra.mxu0 0.0
    %183 = vmatprep.subr.mxu0 0.0
    %184 = vmatpush1.msra.mxu0 0.0
    %185 = vmatprep.subr.mxu0 0.0
    %186 = vmatpush1.msra.mxu0 0.0
    %187 = vmatprep.subr.mxu0 0.0
    %188 = vmatpush1.msra.mxu0 0.0
    %189 = vmatprep.subr.mxu0 0.0
    %190 = vmatpush1.msra.mxu0 0.0
    %191 = vmatprep.subr.mxu0 0.0
    %192 = vmatpush1.msra.mxu0 0.0
    %193 = vmatprep.subr.mxu0 0.0
    %194 = vmatpush1.msra.mxu0 0.0
    %195 = vmatprep.subr.mxu0 0.0
    %196 = vmatpush1.msra.mxu0 0.0
    %197 = vmatprep.subr.mxu0 0.0
    %198 = vmatpush1.msra.mxu0 0.0
    %199 = vmatprep.subr.mxu0 0.0
    %200 = vmatpush1.msra.mxu0 0.0
    %201 = vmatprep.subr.mxu0 0.0
    %202 = vmatpush1.msra.mxu0 0.0
    %203 = vmatprep.mubr.f32.mxu0 0.0
    %204 = vmatmul.mubr.f32.gmra.mrb[0].mxu0 %v48
    %v205 = vpop.f32.mrb[0].mxu0
    %v206 = vadd.f32 0.0, %v205
    %v207 = vpop.f32.mrb[0].mxu0
    %v208 = vadd.f32 0.0, %v207
    %209 = vmatprep.mubr.f32.mxu0 0.0
    %210 = vmatmul.mubr.f32.gmra.mrb[0].mxu0 %v51
    %v211 = vpop.f32.mrb[0].mxu0
    %v212 = vadd.f32 0.0, %v211
    %v213 = vpop.f32.mrb[0].mxu0
    %v214 = vadd.f32 0.0, %v213
    %215 = vdwg.mxu0
    %s216 = scalar_lea.vmem [#allocation7], 32
    %217 = vst [vmem:[%s216] sm:$0xff] %v206
    %218 = vst [vmem:[%s216 + $0x8] sm:$0xff] %v208
    %219 = vst [vmem:[%s216 + $0x10] sm:$0xff] %v212
    %220 = vst [vmem:[%s216 + $0x18] sm:$0xff] %v214
    // Predicated region
    $region18: #{tpu_custom_call.1} parent=1 // pred_check
      _
    $region19: #{tpu_custom_call.1} parent=1 // pred_check_branch
      %222 = sbr.rel (0) target = $region21
    $region20: #{tpu_custom_call.1} parent=1 // pred_region
      %s224 = ssub.s32 1024, 1024
      %225 = vsyncadd [#allocation4], %s224
      %s226 = sshll.u32 [#allocation7], 4
      %s227 = int_to_ptr.vmem [resolvable:$true] %s226
      %232 = dma.vmem_to_hbm [thread:$0]  %s227, 1024, %s2, [#allocation4], 256, 256, 16
    $region21: #{tpu_custom_call.1} parent=1 // pred_fallthru
      _
    // Predicated region
    $region22: #{tpu_custom_call.1} parent=1 // pred_check
      _
    $region23: #{tpu_custom_call.1} parent=1 // pred_check_branch
      %234 = sbr.rel (0) target = $region25
    $region24: #{tpu_custom_call.1} parent=1 // pred_region
      %235 = dma.done [#allocation4], 1024
    $region25: #{tpu_custom_call.1} parent=1 // pred_fallthru
      _
    %236 = vsyncpa [#allocation3], 1
    %237 = vsyncpa [#allocation6], 1
    %238 = vsyncpa [#allocation4], 1

</llo_original>
